<compile_context>
chip_gen: v7x
topology: tpu7x:2x2x1
jax: 0.10.0
libtpu: 0.0.40
codegen_flags: <defaults>
</compile_context>

<pallas_src>
import functools

import jax
import jax.numpy as jnp
from jax.experimental import pallas as pl
from jax.experimental.pallas import tpu as pltpu

LANE = 128


def _round_up(v, m):
    return ((v + m - 1) // m) * m


def _mlp_kernel(n_layers, x_ref, *refs):
    """Fused MLP forward. refs = (w1, b1, w2, b2, ..., wL, bL, out_ref)."""
    out_ref = refs[-1]
    param_refs = refs[:-1]

    x = x_ref[...]                      # (TB, in_dim) f32
    w1 = param_refs[0][...]             # (in_dim, H_pad)
    b1 = param_refs[1][...]             # (1, H_pad)

    # First layer: tiny-K contraction done on the VPU as broadcast FMAs.
    # TODO(synk): verify in a bundle dump that x[:, k:k+1] lowers to an XLU
    # lane-broadcast (not a VMEM relayout); if not, benchmark the MXU path.
    h = b1
    for k in range(x.shape[1]):
        h = h + x[:, k:k + 1] * w1[k:k + 1, :]
    if n_layers > 1:
        h = jnp.maximum(h, 0.0)

    for i in range(1, n_layers):
        w = param_refs[2 * i][...]
        b = param_refs[2 * i + 1][...]
        h = jnp.dot(h, w, preferred_element_type=jnp.float32) + b
        if i < n_layers - 1:
            h = jnp.maximum(h, 0.0)     # ReLU between hidden layers only

    # Narrow (tile_b, out_dim) store — block last dim equals the full array dim,
    # so no padded output slab is ever written to HBM.
    out_ref[...] = h[:, :out_ref.shape[1]].astype(out_ref.dtype)


def prepare_params(params):
    """One-time parameter padding (hoisted out of the forward path).

    Hidden/output feature dims are zero-padded to multiples of 128 so in-kernel
    activations are lane-dense. Zero padding is exact: padded units get bias 0
    (ReLU(0)=0) and the matching rows of the next weight matrix are zero; padded
    output columns are never stored (kernel writes only out_dim columns).
    Returns (padded_params, layer_dims) where layer_dims are the original
    (fan_in, fan_out) per layer.
    """
    padded, dims = [], []
    for li, (w, b) in enumerate(params):
        fan_in, fan_out = w.shape
        dims.append((fan_in, fan_out))
        pad_in = fan_in if li == 0 else _round_up(fan_in, LANE)
        pad_out = _round_up(fan_out, LANE)
        w_p = jnp.zeros((pad_in, pad_out), w.dtype).at[:fan_in, :fan_out].set(w)
        b_p = jnp.zeros((1, pad_out), b.dtype).at[:, :fan_out].set(b)
        padded.append((w_p, b_p))
    return padded, dims


def _pick_tile_b(n_rows, max_tile=4096):
    """Batch tile: amortize ~0.35us/step pipeline overhead.

    v7x has 2 TensorCores -> split the batch into 2 equal 'parallel' grid steps;
    v5e/v6e have 1 TC -> prefer grid=1 (tile_b = N) when it fits.
    """
    try:
        kind = jax.devices()[0].device_kind.lower()
    except Exception:  # pragma: no cover - defensive
        kind = ""
    if "v7" in kind and n_rows > 8:
        tile = _round_up(pl.cdiv(n_rows, 2), 8)
    else:
        tile = _round_up(max(n_rows, 8), 8)
    return max(8, min(tile, _round_up(max_tile, 8)))


def baarle_net_forward(x, padded_params, layer_dims, *, max_tile=4096):
    """x: (N, in_dim) f32. padded_params/layer_dims from prepare_params()."""
    N, in_dim = x.shape
    n_layers = len(padded_params)
    assert layer_dims[0][0] == in_dim, (layer_dims[0], in_dim)
    out_dim = layer_dims[-1][1]

    tile_b = _pick_tile_b(N, max_tile)
    grid = (pl.cdiv(N, tile_b),)
    # If N % tile_b != 0 the last step computes on out-of-bounds padded rows;
    # the MLP is row-independent and Pallas masks the OOB writeback, so no
    # in-kernel masking is required.

    in_specs = [pl.BlockSpec((tile_b, in_dim), lambda i: (i, 0))]
    flat_params = []
    for (w, b) in padded_params:
        # Resident constant blocks: constant index_map, single-buffered.
        in_specs.append(pl.BlockSpec(w.shape, lambda i: (0, 0),
                                     pipeline_mode=pl.Buffered(1)))
        in_specs.append(pl.BlockSpec(b.shape, lambda i: (0, 0),
                                     pipeline_mode=pl.Buffered(1)))
        flat_params.extend([w, b])

    out_specs = pl.BlockSpec((tile_b, out_dim), lambda i: (i, 0))

    # Advisory cost estimate: real (unpadded) FLOPs; weights counted once.
    flops = sum(2 * N * fi * fo for (fi, fo) in layer_dims)
    itemsize = x.dtype.itemsize
    bytes_accessed = (x.size + N * out_dim) * itemsize
    bytes_accessed += sum((w.size + b.size) * w.dtype.itemsize
                          for (w, b) in padded_params)
    cost = pl.CostEstimate(flops=int(flops), transcendentals=0,
                           bytes_accessed=int(bytes_accessed))

    return pl.pallas_call(
        functools.partial(_mlp_kernel, n_layers),
        out_shape=jax.ShapeDtypeStruct((N, out_dim), x.dtype),
        grid_spec=pltpu.PrefetchScalarGridSpec(
            num_scalar_prefetch=0,
            grid=grid,
            in_specs=in_specs,
            out_specs=out_specs,
        ),
        compiler_params=pltpu.CompilerParams(
            dimension_semantics=("parallel",),
        ),
        cost_estimate=cost,
    )(x, *flat_params)


def init_baarle_net_params(key, hidden_layers=(64,), in_dim=2, out_dim=2):
    """Deterministic init mirroring PyTorch nn.Linear default U[-1/sqrt(fan_in), +1/sqrt(fan_in)]."""
    dims = [in_dim] + list(hidden_layers) + [out_dim]
    params = []
    for i in range(len(dims) - 1):
        fan_in, fan_out = dims[i], dims[i + 1]
        key, kw, kb = jax.random.split(key, 3)
        bound = 1.0 / jnp.sqrt(jnp.float32(fan_in))
        w = jax.random.uniform(kw, (fan_in, fan_out), jnp.float32, -bound, bound)
        b = jax.random.uniform(kb, (1, fan_out), jnp.float32, -bound, bound)
        params.append((w, b))
    return params


def baarle_net_reference(x, params):
    """Plain-JAX reference for correctness check."""
    h = x
    for i, (w, b) in enumerate(params):
        h = h @ w + b
        if i < len(params) - 1:
            h = jnp.maximum(h, 0.0)
    return h


if __name__ == "__main__":
    key = jax.random.PRNGKey(0)
    key, kx = jax.random.split(key)

    hidden_layers = [64]          # BaarleNet default
    batch = 256
    x = jax.random.normal(kx, (batch, 2), jnp.float32)

    params = init_baarle_net_params(key, hidden_layers)
    padded_params, layer_dims = prepare_params(params)   # hoisted, one-time

    out = baarle_net_forward(x, padded_params, layer_dims)
    out = jax.block_until_ready(out)

    ref = baarle_net_reference(x, params)
    assert out.shape == (batch, 2), out.shape
    assert jnp.allclose(out, ref, atol=1e-5, rtol=1e-5), (out, ref)

    print("KERNEL_OK")
</pallas_src>

<mosaic_0001>
module attributes {stable_mosaic.version = 11 : i64} {
  func.func @_mlp_kernel(%arg0: i32, %arg1: memref<256x2xf32, #tpu.memory_space<vmem>>, %arg2: memref<2x128xf32, #tpu.memory_space<vmem>>, %arg3: memref<1x128xf32, #tpu.memory_space<vmem>>, %arg4: memref<128x128xf32, #tpu.memory_space<vmem>>, %arg5: memref<1x128xf32, #tpu.memory_space<vmem>>, %arg6: memref<256x2xf32, #tpu.memory_space<vmem>>) attributes {dimension_semantics = [#tpu.dimension_semantics<parallel>], iteration_bounds = array<i64: 1>, scalar_prefetch = 0 : i64, scratch_operands = 0 : i64, tpu.core_type = #tpu.core_type<tc>, window_params = [{transform_indices = @transform_0, window_bounds = array<i64: 256, 2>}, {pipeline_mode = #tpu.pipeline_mode<synchronous>, transform_indices = @transform_1, window_bounds = array<i64: 2, 128>}, {pipeline_mode = #tpu.pipeline_mode<synchronous>, transform_indices = @transform_2, window_bounds = array<i64: 1, 128>}, {pipeline_mode = #tpu.pipeline_mode<synchronous>, transform_indices = @transform_3, window_bounds = array<i64: 128, 128>}, {pipeline_mode = #tpu.pipeline_mode<synchronous>, transform_indices = @transform_4, window_bounds = array<i64: 1, 128>}, {transform_indices = @transform_5, window_bounds = array<i64: 256, 2>}]} {
    %c0 = arith.constant 0 : index
    %c0_0 = arith.constant 0 : index
    %0 = vector.load %arg1[%c0, %c0_0] : memref<256x2xf32, #tpu.memory_space<vmem>>, vector<256x2xf32>
    %c0_1 = arith.constant 0 : index
    %c0_2 = arith.constant 0 : index
    %1 = vector.load %arg2[%c0_1, %c0_2] : memref<2x128xf32, #tpu.memory_space<vmem>>, vector<2x128xf32>
    %c0_3 = arith.constant 0 : index
    %c0_4 = arith.constant 0 : index
    %2 = vector.load %arg3[%c0_3, %c0_4] : memref<1x128xf32, #tpu.memory_space<vmem>>, vector<1x128xf32>
    %3 = vector.extract_strided_slice %0 {offsets = [0, 0], sizes = [256, 1], strides = [1, 1]} : vector<256x2xf32> to vector<256x1xf32>
    %4 = vector.extract_strided_slice %1 {offsets = [0, 0], sizes = [1, 128], strides = [1, 1]} : vector<2x128xf32> to vector<1x128xf32>
    %5 = vector.broadcast %3 : vector<256x1xf32> to vector<256x128xf32>
    %6 = vector.broadcast %4 : vector<1x128xf32> to vector<256x128xf32>
    %7 = arith.mulf %5, %6 : vector<256x128xf32>
    %8 = vector.broadcast %2 : vector<1x128xf32> to vector<256x128xf32>
    %9 = arith.addf %8, %7 : vector<256x128xf32>
    %10 = vector.extract_strided_slice %0 {offsets = [0, 1], sizes = [256, 1], strides = [1, 1]} : vector<256x2xf32> to vector<256x1xf32>
    %11 = vector.extract_strided_slice %1 {offsets = [1, 0], sizes = [1, 128], strides = [1, 1]} : vector<2x128xf32> to vector<1x128xf32>
    %12 = vector.broadcast %10 : vector<256x1xf32> to vector<256x128xf32>
    %13 = vector.broadcast %11 : vector<1x128xf32> to vector<256x128xf32>
    %14 = arith.mulf %12, %13 : vector<256x128xf32>
    %15 = arith.addf %9, %14 : vector<256x128xf32>
    %cst = arith.constant 0.000000e+00 : f32
    %16 = vector.broadcast %cst : f32 to vector<256x128xf32>
    %17 = arith.maximumf %15, %16 : vector<256x128xf32>
    %c0_5 = arith.constant 0 : index
    %c0_6 = arith.constant 0 : index
    %18 = vector.load %arg4[%c0_5, %c0_6] : memref<128x128xf32, #tpu.memory_space<vmem>>, vector<128x128xf32>
    %c0_7 = arith.constant 0 : index
    %c0_8 = arith.constant 0 : index
    %19 = vector.load %arg5[%c0_7, %c0_8] : memref<1x128xf32, #tpu.memory_space<vmem>>, vector<1x128xf32>
    %cst_9 = arith.constant dense<0.000000e+00> : vector<256x128xf32>
    %20 = tpu.matmul %17, %18, %cst_9 {dimension_numbers = #tpu.dot_dimension_numbers<[1], [0], [0], [1], [0, 0, 1, 1], [], []>} : vector<256x128xf32>, vector<128x128xf32>, vector<256x128xf32> -> vector<256x128xf32>
    %21 = vector.broadcast %19 : vector<1x128xf32> to vector<256x128xf32>
    %22 = arith.addf %20, %21 : vector<256x128xf32>
    %23 = vector.extract_strided_slice %22 {offsets = [0, 0], sizes = [256, 2], strides = [1, 1]} : vector<256x128xf32> to vector<256x2xf32>
    %c0_10 = arith.constant 0 : index
    %c0_11 = arith.constant 0 : index
    %24 = vector.load %arg6[%c0_10, %c0_11] : memref<256x2xf32, #tpu.memory_space<vmem>>, vector<256x2xf32>
    tpu.vector_store %arg6[%c0_10, %c0_11], %23 {strides = array<i32>} : memref<256x2xf32, #tpu.memory_space<vmem>>, vector<256x2xf32>,
    return
  }
  func.func @transform_0(%arg0: i32) -> (i32, i32) {
    %c0_i32 = arith.constant 0 : i32
    %c0_i32_0 = arith.constant 0 : i32
    return %arg0, %c0_i32 : i32, i32
  }
  func.func @transform_1(%arg0: i32) -> (i32, i32) {
    %c0_i32 = arith.constant 0 : i32
    %c0_i32_0 = arith.constant 0 : i32
    %c0_i32_1 = arith.constant 0 : i32
    return %c0_i32, %c0_i32_0 : i32, i32
  }
  func.func @transform_2(%arg0: i32) -> (i32, i32) {
    %c0_i32 = arith.constant 0 : i32
    %c0_i32_0 = arith.constant 0 : i32
    %c0_i32_1 = arith.constant 0 : i32
    return %c0_i32, %c0_i32_0 : i32, i32
  }
  func.func @transform_3(%arg0: i32) -> (i32, i32) {
    %c0_i32 = arith.constant 0 : i32
    %c0_i32_0 = arith.constant 0 : i32
    %c0_i32_1 = arith.constant 0 : i32
    return %c0_i32, %c0_i32_0 : i32, i32
  }
  func.func @transform_4(%arg0: i32) -> (i32, i32) {
    %c0_i32 = arith.constant 0 : i32
    %c0_i32_0 = arith.constant 0 : i32
    %c0_i32_1 = arith.constant 0 : i32
    return %c0_i32, %c0_i32_0 : i32, i32
  }
  func.func @transform_5(%arg0: i32) -> (i32, i32) {
    %c0_i32 = arith.constant 0 : i32
    %c0_i32_0 = arith.constant 0 : i32
    return %arg0, %c0_i32 : i32, i32
  }
}

</mosaic_0001>

<llo_original>
// kernel: tpu_custom_call.1
$region0: #{tpu_custom_call.1}
  #allocation0 [shape = 'u32[]', space=smem, size = 0x4, offset = 0x4, fixed_abs, tag = 'smem constant byte address 0x4 - core index']
  #allocation1 [shape = 'u32[144,128]{1,0:T(1,128)}', space=vmem, size = 0x12000, scoped, tag = 'internal scratch']
  %s0 = inlined_call_operand.vmem [shape: f32[256,2], index: 0, kind: input, shape index: {}]
  %s1 = inlined_call_operand.vmem [shape: f32[2,128], index: 1, kind: input, shape index: {}]
  %s2 = inlined_call_operand.vmem [shape: f32[1,128], index: 2, kind: input, shape index: {}]
  %s3 = inlined_call_operand.vmem [shape: f32[128,128], index: 3, kind: input, shape index: {}]
  %s4 = inlined_call_operand.vmem [shape: f32[1,128], index: 4, kind: input, shape index: {}]
  %s5 = inlined_call_operand.vmem [shape: f32[256,2], index: 5, kind: output, shape index: {}]
  %s6 = sld [smem:[#allocation0]]
  $region30: #{tpu_custom_call.1} parent=0
    _
  %s8 = ssub.s32 1, %s6
  %s9 = scalar_select 0, %s8, %s6
  // Predicated region
  $region2: #{tpu_custom_call.1} parent=0 // pred_check
    _
  $region3: #{tpu_custom_call.1} parent=0 // pred_check_branch
    %11 = sbr.rel (0) target = $region5
  $region4: #{tpu_custom_call.1} parent=0 // pred_region
    _
  $region5: #{tpu_custom_call.1} parent=0 // pred_fallthru
    _
  // Predicated region
  $region6: #{tpu_custom_call.1} parent=0 // pred_check
    _
  $region7: #{tpu_custom_call.1} parent=0 // pred_check_branch
    %13 = sbr.rel (0) target = $region9
  $region8: #{tpu_custom_call.1} parent=0 // pred_region
    _
  $region9: #{tpu_custom_call.1} parent=0 // pred_fallthru
    _
  // Predicated region
  $region10: #{tpu_custom_call.1} parent=0 // pred_check
    _
  $region11: #{tpu_custom_call.1} parent=0 // pred_check_branch
    %15 = sbr.rel (0) target = $region13
  $region12: #{tpu_custom_call.1} parent=0 // pred_region
    _
  $region13: #{tpu_custom_call.1} parent=0 // pred_fallthru
    _
  // Predicated region
  $region14: #{tpu_custom_call.1} parent=0 // pred_check
    _
  $region15: #{tpu_custom_call.1} parent=0 // pred_check_branch
    %17 = sbr.rel (0) target = $region17
  $region16: #{tpu_custom_call.1} parent=0 // pred_region
    _
  $region17: #{tpu_custom_call.1} parent=0 // pred_fallthru
    _
  // Predicated region
  $region18: #{tpu_custom_call.1} parent=0 // pred_check
    _
  $region19: #{tpu_custom_call.1} parent=0 // pred_check_branch
    %19 = sbr.rel (0) target = $region21
  $region20: #{tpu_custom_call.1} parent=0 // pred_region
    _
  $region21: #{tpu_custom_call.1} parent=0 // pred_fallthru
    _
  %v20 = vld [vmem:[%s0] sm:$0xff]
  %v21 = vld [vmem:[%s0 + $0x8] sm:$0xff]
  %v22 = vld [vmem:[%s0 + $0x10] sm:$0xff]
  %v23 = vld [vmem:[%s0 + $0x18] sm:$0xff]
  %v24 = vld [vmem:[%s0 + $0x20] sm:$0xff]
  %v25 = vld [vmem:[%s0 + $0x28] sm:$0xff]
  %v26 = vld [vmem:[%s0 + $0x30] sm:$0xff]
  %v27 = vld [vmem:[%s0 + $0x38] sm:$0xff]
  %v28 = vld [vmem:[%s0 + $0x40] sm:$0xff]
  %v29 = vld [vmem:[%s0 + $0x48] sm:$0xff]
  %v30 = vld [vmem:[%s0 + $0x50] sm:$0xff]
  %v31 = vld [vmem:[%s0 + $0x58] sm:$0xff]
  %v32 = vld [vmem:[%s0 + $0x60] sm:$0xff]
  %v33 = vld [vmem:[%s0 + $0x68] sm:$0xff]
  %v34 = vld [vmem:[%s0 + $0x70] sm:$0xff]
  %v35 = vld [vmem:[%s0 + $0x78] sm:$0xff]
  %v36 = vld [vmem:[%s0 + $0x80] sm:$0xff]
  %v37 = vld [vmem:[%s0 + $0x88] sm:$0xff]
  %v38 = vld [vmem:[%s0 + $0x90] sm:$0xff]
  %v39 = vld [vmem:[%s0 + $0x98] sm:$0xff]
  %v40 = vld [vmem:[%s0 + $0xa0] sm:$0xff]
  %v41 = vld [vmem:[%s0 + $0xa8] sm:$0xff]
  %v42 = vld [vmem:[%s0 + $0xb0] sm:$0xff]
  %v43 = vld [vmem:[%s0 + $0xb8] sm:$0xff]
  %v44 = vld [vmem:[%s0 + $0xc0] sm:$0xff]
  %v45 = vld [vmem:[%s0 + $0xc8] sm:$0xff]
  %v46 = vld [vmem:[%s0 + $0xd0] sm:$0xff]
  %v47 = vld [vmem:[%s0 + $0xd8] sm:$0xff]
  %v48 = vld [vmem:[%s0 + $0xe0] sm:$0xff]
  %v49 = vld [vmem:[%s0 + $0xe8] sm:$0xff]
  %v50 = vld [vmem:[%s0 + $0xf0] sm:$0xff]
  %v51 = vld [vmem:[%s0 + $0xf8] sm:$0xff]
  %v52 = vld [vmem:[%s1] sm:$0x3]
  %v53 = vld [vmem:[%s2] sm:$0x1]
  %55 = vset.pattern.permute.xlu0 0
  %56 = vperm.xlu0 %55, %v20
  %v57 = vpop.permute.xlu0 %56
  %60 = vset.pattern.permute.xlu0 0
  %61 = vperm.xlu0 %60, %v21
  %v62 = vpop.permute.xlu0 %61
  %65 = vset.pattern.permute.xlu0 0
  %66 = vperm.xlu0 %65, %v22
  %v67 = vpop.permute.xlu0 %66
  %70 = vset.pattern.permute.xlu0 0
  %71 = vperm.xlu0 %70, %v23
  %v72 = vpop.permute.xlu0 %71
  %75 = vset.pattern.permute.xlu0 0
  %76 = vperm.xlu0 %75, %v24
  %v77 = vpop.permute.xlu0 %76
  %80 = vset.pattern.permute.xlu0 0
  %81 = vperm.xlu0 %80, %v25
  %v82 = vpop.permute.xlu0 %81
  %85 = vset.pattern.permute.xlu0 0
  %86 = vperm.xlu0 %85, %v26
  %v87 = vpop.permute.xlu0 %86
  %90 = vset.pattern.permute.xlu0 0
  %91 = vperm.xlu0 %90, %v27
  %v92 = vpop.permute.xlu0 %91
  %95 = vset.pattern.permute.xlu0 0
  %96 = vperm.xlu0 %95, %v28
  %v97 = vpop.permute.xlu0 %96
  %100 = vset.pattern.permute.xlu0 0
  %101 = vperm.xlu0 %100, %v29
  %v102 = vpop.permute.xlu0 %101
  %105 = vset.pattern.permute.xlu0 0
  %106 = vperm.xlu0 %105, %v30
  %v107 = vpop.permute.xlu0 %106
  %110 = vset.pattern.permute.xlu0 0
  %111 = vperm.xlu0 %110, %v31
  %v112 = vpop.permute.xlu0 %111
  %115 = vset.pattern.permute.xlu0 0
  %116 = vperm.xlu0 %115, %v32
  %v117 = vpop.permute.xlu0 %116
  %120 = vset.pattern.permute.xlu0 0
  %121 = vperm.xlu0 %120, %v33
  %v122 = vpop.permute.xlu0 %121
  %125 = vset.pattern.permute.xlu0 0
  %126 = vperm.xlu0 %125, %v34
  %v127 = vpop.permute.xlu0 %126
  %130 = vset.pattern.permute.xlu0 0
  %131 = vperm.xlu0 %130, %v35
  %v132 = vpop.permute.xlu0 %131
  %135 = vset.pattern.permute.xlu0 0
  %136 = vperm.xlu0 %135, %v36
  %v137 = vpop.permute.xlu0 %136
  %140 = vset.pattern.permute.xlu0 0
  %141 = vperm.xlu0 %140, %v37
  %v142 = vpop.permute.xlu0 %141
  %145 = vset.pattern.permute.xlu0 0
  %146 = vperm.xlu0 %145, %v38
  %v147 = vpop.permute.xlu0 %146
  %150 = vset.pattern.permute.xlu0 0
  %151 = vperm.xlu0 %150, %v39
  %v152 = vpop.permute.xlu0 %151
  %155 = vset.pattern.permute.xlu0 0
  %156 = vperm.xlu0 %155, %v40
  %v157 = vpop.permute.xlu0 %156
  %160 = vset.pattern.permute.xlu0 0
  %161 = vperm.xlu0 %160, %v41
  %v162 = vpop.permute.xlu0 %161
  %165 = vset.pattern.permute.xlu0 0
  %166 = vperm.xlu0 %165, %v42
  %v167 = vpop.permute.xlu0 %166
  %170 = vset.pattern.permute.xlu0 0
  %171 = vperm.xlu0 %170, %v43
  %v172 = vpop.permute.xlu0 %171
  %175 = vset.pattern.permute.xlu0 0
  %176 = vperm.xlu0 %175, %v44
  %v177 = vpop.permute.xlu0 %176
  %180 = vset.pattern.permute.xlu0 0
  %181 = vperm.xlu0 %180, %v45
  %v182 = vpop.permute.xlu0 %181
  %185 = vset.pattern.permute.xlu0 0
  %186 = vperm.xlu0 %185, %v46
  %v187 = vpop.permute.xlu0 %186
  %190 = vset.pattern.permute.xlu0 0
  %191 = vperm.xlu0 %190, %v47
  %v192 = vpop.permute.xlu0 %191
  %195 = vset.pattern.permute.xlu0 0
  %196 = vperm.xlu0 %195, %v48
  %v197 = vpop.permute.xlu0 %196
  %200 = vset.pattern.permute.xlu0 0
  %201 = vperm.xlu0 %200, %v49
  %v202 = vpop.permute.xlu0 %201
  %205 = vset.pattern.permute.xlu0 0
  %206 = vperm.xlu0 %205, %v50
  %v207 = vpop.permute.xlu0 %206
  %210 = vset.pattern.permute.xlu0 0
  %211 = vperm.xlu0 %210, %v51
  %v212 = vpop.permute.xlu0 %211
  %v214 = vlaneseq
  %v215 = vshrl.u32 %v214, 7
  %v216 = vsub.s32 0, %v215
  %v217 = vrot.slane %v52, %v216
  %v218 = vmul.f32 %v57, %v217
  %v219 = vmul.f32 %v62, %v217
  %v220 = vmul.f32 %v67, %v217
  %v221 = vmul.f32 %v72, %v217
  %v222 = vmul.f32 %v77, %v217
  %v223 = vmul.f32 %v82, %v217
  %v224 = vmul.f32 %v87, %v217
  %v225 = vmul.f32 %v92, %v217
  %v226 = vmul.f32 %v97, %v217
  %v227 = vmul.f32 %v102, %v217
  %v228 = vmul.f32 %v107, %v217
  %v229 = vmul.f32 %v112, %v217
  %v230 = vmul.f32 %v117, %v217
  %v231 = vmul.f32 %v122, %v217
  %v232 = vmul.f32 %v127, %v217
  %v233 = vmul.f32 %v132, %v217
  %v234 = vmul.f32 %v137, %v217
  %v235 = vmul.f32 %v142, %v217
  %v236 = vmul.f32 %v147, %v217
  %v237 = vmul.f32 %v152, %v217
  %v238 = vmul.f32 %v157, %v217
  %v239 = vmul.f32 %v162, %v217
  %v240 = vmul.f32 %v167, %v217
  %v241 = vmul.f32 %v172, %v217
  %v242 = vmul.f32 %v177, %v217
  %v243 = vmul.f32 %v182, %v217
  %v244 = vmul.f32 %v187, %v217
  %v245 = vmul.f32 %v192, %v217
  %v246 = vmul.f32 %v197, %v217
  %v247 = vmul.f32 %v202, %v217
  %v248 = vmul.f32 %v207, %v217
  %v249 = vmul.f32 %v212, %v217
  %v251 = vlaneseq
  %v252 = vshrl.u32 %v251, 7
  %v253 = vsub.s32 0, %v252
  %v254 = vrot.slane %v53, %v253
  %v256 = vadd.f32 %v254, %v218
  %v257 = vadd.f32 %v254, %v219
  %v258 = vadd.f32 %v254, %v220
  %v259 = vadd.f32 %v254, %v221
  %v260 = vadd.f32 %v254, %v222
  %v261 = vadd.f32 %v254, %v223
  %v262 = vadd.f32 %v254, %v224
  %v263 = vadd.f32 %v254, %v225
  %v264 = vadd.f32 %v254, %v226
  %v265 = vadd.f32 %v254, %v227
  %v266 = vadd.f32 %v254, %v228
  %v267 = vadd.f32 %v254, %v229
  %v268 = vadd.f32 %v254, %v230
  %v269 = vadd.f32 %v254, %v231
  %v270 = vadd.f32 %v254, %v232
  %v271 = vadd.f32 %v254, %v233
  %v272 = vadd.f32 %v254, %v234
  %v273 = vadd.f32 %v254, %v235
  %v274 = vadd.f32 %v254, %v236
  %v275 = vadd.f32 %v254, %v237
  %v276 = vadd.f32 %v254, %v238
  %v277 = vadd.f32 %v254, %v239
  %v278 = vadd.f32 %v254, %v240
  %v279 = vadd.f32 %v254, %v241
  %v280 = vadd.f32 %v254, %v242
  %v281 = vadd.f32 %v254, %v243
  %v282 = vadd.f32 %v254, %v244
  %v283 = vadd.f32 %v254, %v245
  %v284 = vadd.f32 %v254, %v246
  %v285 = vadd.f32 %v254, %v247
  %v286 = vadd.f32 %v254, %v248
  %v287 = vadd.f32 %v254, %v249
  %288 = vset.pattern.permute.xlu0 1
  %289 = vperm.xlu0 %288, %v20
  %v290 = vpop.permute.xlu0 %289
  %292 = vset.pattern.permute.xlu0 1
  %293 = vperm.xlu0 %292, %v21
  %v294 = vpop.permute.xlu0 %293
  %296 = vset.pattern.permute.xlu0 1
  %297 = vperm.xlu0 %296, %v22
  %v298 = vpop.permute.xlu0 %297
  %300 = vset.pattern.permute.xlu0 1
  %301 = vperm.xlu0 %300, %v23
  %v302 = vpop.permute.xlu0 %301
  %304 = vset.pattern.permute.xlu0 1
  %305 = vperm.xlu0 %304, %v24
  %v306 = vpop.permute.xlu0 %305
  %308 = vset.pattern.permute.xlu0 1
  %309 = vperm.xlu0 %308, %v25
  %v310 = vpop.permute.xlu0 %309
  %312 = vset.pattern.permute.xlu0 1
  %313 = vperm.xlu0 %312, %v26
  %v314 = vpop.permute.xlu0 %313
  %316 = vset.pattern.permute.xlu0 1
  %317 = vperm.xlu0 %316, %v27
  %v318 = vpop.permute.xlu0 %317
  %320 = vset.pattern.permute.xlu0 1
  %321 = vperm.xlu0 %320, %v28
  %v322 = vpop.permute.xlu0 %321
  %324 = vset.pattern.permute.xlu0 1
  %325 = vperm.xlu0 %324, %v29
  %v326 = vpop.permute.xlu0 %325
  %328 = vset.pattern.permute.xlu0 1
  %329 = vperm.xlu0 %328, %v30
  %v330 = vpop.permute.xlu0 %329
  %332 = vset.pattern.permute.xlu0 1
  %333 = vperm.xlu0 %332, %v31
  %v334 = vpop.permute.xlu0 %333
  %336 = vset.pattern.permute.xlu0 1
  %337 = vperm.xlu0 %336, %v32
  %v338 = vpop.permute.xlu0 %337
  %340 = vset.pattern.permute.xlu0 1
  %341 = vperm.xlu0 %340, %v33
  %v342 = vpop.permute.xlu0 %341
  %344 = vset.pattern.permute.xlu0 1
  %345 = vperm.xlu0 %344, %v34
  %v346 = vpop.permute.xlu0 %345
  %348 = vset.pattern.permute.xlu0 1
  %349 = vperm.xlu0 %348, %v35
  %v350 = vpop.permute.xlu0 %349
  %352 = vset.pattern.permute.xlu0 1
  %353 = vperm.xlu0 %352, %v36
  %v354 = vpop.permute.xlu0 %353
  %356 = vset.pattern.permute.xlu0 1
  %357 = vperm.xlu0 %356, %v37
  %v358 = vpop.permute.xlu0 %357
  %360 = vset.pattern.permute.xlu0 1
  %361 = vperm.xlu0 %360, %v38
  %v362 = vpop.permute.xlu0 %361
  %364 = vset.pattern.permute.xlu0 1
  %365 = vperm.xlu0 %364, %v39
  %v366 = vpop.permute.xlu0 %365
  %368 = vset.pattern.permute.xlu0 1
  %369 = vperm.xlu0 %368, %v40
  %v370 = vpop.permute.xlu0 %369
  %372 = vset.pattern.permute.xlu0 1
  %373 = vperm.xlu0 %372, %v41
  %v374 = vpop.permute.xlu0 %373
  %376 = vset.pattern.permute.xlu0 1
  %377 = vperm.xlu0 %376, %v42
  %v378 = vpop.permute.xlu0 %377
  %380 = vset.pattern.permute.xlu0 1
  %381 = vperm.xlu0 %380, %v43
  %v382 = vpop.permute.xlu0 %381
  %384 = vset.pattern.permute.xlu0 1
  %385 = vperm.xlu0 %384, %v44
  %v386 = vpop.permute.xlu0 %385
  %388 = vset.pattern.permute.xlu0 1
  %389 = vperm.xlu0 %388, %v45
  %v390 = vpop.permute.xlu0 %389
  %392 = vset.pattern.permute.xlu0 1
  %393 = vperm.xlu0 %392, %v46
  %v394 = vpop.permute.xlu0 %393
  %396 = vset.pattern.permute.xlu0 1
  %397 = vperm.xlu0 %396, %v47
  %v398 = vpop.permute.xlu0 %397
  %400 = vset.pattern.permute.xlu0 1
  %401 = vperm.xlu0 %400, %v48
  %v402 = vpop.permute.xlu0 %401
  %404 = vset.pattern.permute.xlu0 1
  %405 = vperm.xlu0 %404, %v49
  %v406 = vpop.permute.xlu0 %405
  %408 = vset.pattern.permute.xlu0 1
  %409 = vperm.xlu0 %408, %v50
  %v410 = vpop.permute.xlu0 %409
  %412 = vset.pattern.permute.xlu0 1
  %413 = vperm.xlu0 %412, %v51
  %v414 = vpop.permute.xlu0 %413
  %v416 = vlaneseq
  %v417 = vshrl.u32 %v416, 7
  %v418 = vsub.s32 1, %v417
  %v419 = vrot.slane %v52, %v418
  %v420 = vmul.f32 %v290, %v419
  %v421 = vmul.f32 %v294, %v419
  %v422 = vmul.f32 %v298, %v419
  %v423 = vmul.f32 %v302, %v419
  %v424 = vmul.f32 %v306, %v419
  %v425 = vmul.f32 %v310, %v419
  %v426 = vmul.f32 %v314, %v419
  %v427 = vmul.f32 %v318, %v419
  %v428 = vmul.f32 %v322, %v419
  %v429 = vmul.f32 %v326, %v419
  %v430 = vmul.f32 %v330, %v419
  %v431 = vmul.f32 %v334, %v419
  %v432 = vmul.f32 %v338, %v419
  %v433 = vmul.f32 %v342, %v419
  %v434 = vmul.f32 %v346, %v419
  %v435 = vmul.f32 %v350, %v419
  %v436 = vmul.f32 %v354, %v419
  %v437 = vmul.f32 %v358, %v419
  %v438 = vmul.f32 %v362, %v419
  %v439 = vmul.f32 %v366, %v419
  %v440 = vmul.f32 %v370, %v419
  %v441 = vmul.f32 %v374, %v419
  %v442 = vmul.f32 %v378, %v419
  %v443 = vmul.f32 %v382, %v419
  %v444 = vmul.f32 %v386, %v419
  %v445 = vmul.f32 %v390, %v419
  %v446 = vmul.f32 %v394, %v419
  %v447 = vmul.f32 %v398, %v419
  %v448 = vmul.f32 %v402, %v419
  %v449 = vmul.f32 %v406, %v419
  %v450 = vmul.f32 %v410, %v419
  %v451 = vmul.f32 %v414, %v419
  %v452 = vadd.f32 %v256, %v420
  %v453 = vadd.f32 %v257, %v421
  %v454 = vadd.f32 %v258, %v422
  %v455 = vadd.f32 %v259, %v423
  %v456 = vadd.f32 %v260, %v424
  %v457 = vadd.f32 %v261, %v425
  %v458 = vadd.f32 %v262, %v426
  %v459 = vadd.f32 %v263, %v427
  %v460 = vadd.f32 %v264, %v428
  %v461 = vadd.f32 %v265, %v429
  %v462 = vadd.f32 %v266, %v430
  %v463 = vadd.f32 %v267, %v431
  %v464 = vadd.f32 %v268, %v432
  %v465 = vadd.f32 %v269, %v433
  %v466 = vadd.f32 %v270, %v434
  %v467 = vadd.f32 %v271, %v435
  %v468 = vadd.f32 %v272, %v436
  %v469 = vadd.f32 %v273, %v437
  %v470 = vadd.f32 %v274, %v438
  %v471 = vadd.f32 %v275, %v439
  %v472 = vadd.f32 %v276, %v440
  %v473 = vadd.f32 %v277, %v441
  %v474 = vadd.f32 %v278, %v442
  %v475 = vadd.f32 %v279, %v443
  %v476 = vadd.f32 %v280, %v444
  %v477 = vadd.f32 %v281, %v445
  %v478 = vadd.f32 %v282, %v446
  %v479 = vadd.f32 %v283, %v447
  %v480 = vadd.f32 %v284, %v448
  %v481 = vadd.f32 %v285, %v449
  %v482 = vadd.f32 %v286, %v450
  %v483 = vadd.f32 %v287, %v451
  %v484 = vmax.f32 %v452, 0.0
  %v485 = vmax.f32 %v453, 0.0
  %v486 = vmax.f32 %v454, 0.0
  %v487 = vmax.f32 %v455, 0.0
  %v488 = vmax.f32 %v456, 0.0
  %v489 = vmax.f32 %v457, 0.0
  %v490 = vmax.f32 %v458, 0.0
  %v491 = vmax.f32 %v459, 0.0
  %v492 = vmax.f32 %v460, 0.0
  %v493 = vmax.f32 %v461, 0.0
  %v494 = vmax.f32 %v462, 0.0
  %v495 = vmax.f32 %v463, 0.0
  %v496 = vmax.f32 %v464, 0.0
  %v497 = vmax.f32 %v465, 0.0
  %v498 = vmax.f32 %v466, 0.0
  %v499 = vmax.f32 %v467, 0.0
  %v500 = vmax.f32 %v468, 0.0
  %v501 = vmax.f32 %v469, 0.0
  %v502 = vmax.f32 %v470, 0.0
  %v503 = vmax.f32 %v471, 0.0
  %v504 = vmax.f32 %v472, 0.0
  %v505 = vmax.f32 %v473, 0.0
  %v506 = vmax.f32 %v474, 0.0
  %v507 = vmax.f32 %v475, 0.0
  %v508 = vmax.f32 %v476, 0.0
  %v509 = vmax.f32 %v477, 0.0
  %v510 = vmax.f32 %v478, 0.0
  %v511 = vmax.f32 %v479, 0.0
  %v512 = vmax.f32 %v480, 0.0
  %v513 = vmax.f32 %v481, 0.0
  %v514 = vmax.f32 %v482, 0.0
  %v515 = vmax.f32 %v483, 0.0
  %v516 = vld [vmem:[%s3] sm:$0xff]
  %v517 = vld [vmem:[%s3 + $0x8] sm:$0xff]
  %v518 = vld [vmem:[%s3 + $0x10] sm:$0xff]
  %v519 = vld [vmem:[%s3 + $0x18] sm:$0xff]
  %v520 = vld [vmem:[%s3 + $0x20] sm:$0xff]
  %v521 = vld [vmem:[%s3 + $0x28] sm:$0xff]
  %v522 = vld [vmem:[%s3 + $0x30] sm:$0xff]
  %v523 = vld [vmem:[%s3 + $0x38] sm:$0xff]
  %v524 = vld [vmem:[%s3 + $0x40] sm:$0xff]
  %v525 = vld [vmem:[%s3 + $0x48] sm:$0xff]
  %v526 = vld [vmem:[%s3 + $0x50] sm:$0xff]
  %v527 = vld [vmem:[%s3 + $0x58] sm:$0xff]
  %v528 = vld [vmem:[%s3 + $0x60] sm:$0xff]
  %v529 = vld [vmem:[%s3 + $0x68] sm:$0xff]
  %v530 = vld [vmem:[%s3 + $0x70] sm:$0xff]
  %v531 = vld [vmem:[%s3 + $0x78] sm:$0xff]
  %v532 = vld [vmem:[%s4] sm:$0x1]
  %v534 = vlaneseq
  %v535 = vshrl.u32 %v534, 7
  %v536 = vsub.s32 0, %v535
  %v537 = vrot.slane %v532, %v536
  %539 = vmatprep.subr.mxu0 0.0
  %540 = vmatpush1.msra.mxu0 %v516
  %541 = vmatprep.subr.mxu0 0.0
  %542 = vmatpush1.msra.mxu0 %v517
  %543 = vmatprep.subr.mxu0 0.0
  %544 = vmatpush1.msra.mxu0 %v518
  %545 = vmatprep.subr.mxu0 0.0
  %546 = vmatpush1.msra.mxu0 %v519
  %547 = vmatprep.subr.mxu0 0.0
  %548 = vmatpush1.msra.mxu0 %v520
  %549 = vmatprep.subr.mxu0 0.0
  %550 = vmatpush1.msra.mxu0 %v521
  %551 = vmatprep.subr.mxu0 0.0
  %552 = vmatpush1.msra.mxu0 %v522
  %553 = vmatprep.subr.mxu0 0.0
  %554 = vmatpush1.msra.mxu0 %v523
  %555 = vmatprep.subr.mxu0 0.0
  %556 = vmatpush1.msra.mxu0 %v524
  %557 = vmatprep.subr.mxu0 0.0
  %558 = vmatpush1.msra.mxu0 %v525
  %559 = vmatprep.subr.mxu0 0.0
  %560 = vmatpush1.msra.mxu0 %v526
  %561 = vmatprep.subr.mxu0 0.0
  %562 = vmatpush1.msra.mxu0 %v527
  %563 = vmatprep.subr.mxu0 0.0
  %564 = vmatpush1.msra.mxu0 %v528
  %565 = vmatprep.subr.mxu0 0.0
  %566 = vmatpush1.msra.mxu0 %v529
  %567 = vmatprep.subr.mxu0 0.0
  %568 = vmatpush1.msra.mxu0 %v530
  %569 = vmatprep.subr.mxu0 0.0
  %570 = vmatpush1.msra.mxu0 %v531
  %571 = vmatprep.subr.mxu0 0.0
  %572 = vmatpush1.msra.mxu0 0.0
  %573 = vmatprep.subr.mxu0 0.0
  %574 = vmatpush1.msra.mxu0 0.0
  %575 = vmatprep.subr.mxu0 0.0
  %576 = vmatpush1.msra.mxu0 0.0
  %577 = vmatprep.subr.mxu0 0.0
  %578 = vmatpush1.msra.mxu0 0.0
  %579 = vmatprep.subr.mxu0 0.0
  %580 = vmatpush1.msra.mxu0 0.0
  %581 = vmatprep.subr.mxu0 0.0
  %582 = vmatpush1.msra.mxu0 0.0
  %583 = vmatprep.subr.mxu0 0.0
  %584 = vmatpush1.msra.mxu0 0.0
  %585 = vmatprep.subr.mxu0 0.0
  %586 = vmatpush1.msra.mxu0 0.0
  %587 = vmatprep.subr.mxu0 0.0
  %588 = vmatpush1.msra.mxu0 0.0
  %589 = vmatprep.subr.mxu0 0.0
  %590 = vmatpush1.msra.mxu0 0.0
  %591 = vmatprep.subr.mxu0 0.0
  %592 = vmatpush1.msra.mxu0 0.0
  %593 = vmatprep.subr.mxu0 0.0
  %594 = vmatpush1.msra.mxu0 0.0
  %595 = vmatprep.subr.mxu0 0.0
  %596 = vmatpush1.msra.mxu0 0.0
  %597 = vmatprep.subr.mxu0 0.0
  %598 = vmatpush1.msra.mxu0 0.0
  %599 = vmatprep.subr.mxu0 0.0
  %600 = vmatpush1.msra.mxu0 0.0
  %601 = vmatprep.subr.mxu0 0.0
  %602 = vmatpush1.msra.mxu0 0.0
  %603 = vmatprep.mubr.f32.mxu0 0.0
  %604 = vmatmul.mubr.f32.gmra.mrb[0].mxu0 %v484
  %v605 = vpop.f32.mrb[0].mxu0
  %v606 = vadd.f32 %v537, %v605
  %v607 = vpop.f32.mrb[0].mxu0
  %608 = vmatprep.mubr.f32.mxu0 0.0
  %609 = vmatmul.mubr.f32.gmra.mrb[0].mxu0 %v485
  %v610 = vpop.f32.mrb[0].mxu0
  %v611 = vadd.f32 %v537, %v610
  %v612 = vpop.f32.mrb[0].mxu0
  %613 = vmatprep.mubr.f32.mxu0 0.0
  %614 = vmatmul.mubr.f32.gmra.mrb[0].mxu0 %v486
  %v615 = vpop.f32.mrb[0].mxu0
  %v616 = vadd.f32 %v537, %v615
  %v617 = vpop.f32.mrb[0].mxu0
  %618 = vmatprep.mubr.f32.mxu0 0.0
  %619 = vmatmul.mubr.f32.gmra.mrb[0].mxu0 %v487
  %v620 = vpop.f32.mrb[0].mxu0
  %v621 = vadd.f32 %v537, %v620
  %v622 = vpop.f32.mrb[0].mxu0
  %623 = vmatprep.mubr.f32.mxu0 0.0
  %624 = vmatmul.mubr.f32.gmra.mrb[0].mxu0 %v488
  %v625 = vpop.f32.mrb[0].mxu0
  %v626 = vadd.f32 %v537, %v625
  %v627 = vpop.f32.mrb[0].mxu0
  %628 = vmatprep.mubr.f32.mxu0 0.0
  %629 = vmatmul.mubr.f32.gmra.mrb[0].mxu0 %v489
  %v630 = vpop.f32.mrb[0].mxu0
  %v631 = vadd.f32 %v537, %v630
  %v632 = vpop.f32.mrb[0].mxu0
  %633 = vmatprep.mubr.f32.mxu0 0.0
  %634 = vmatmul.mubr.f32.gmra.mrb[0].mxu0 %v490
  %v635 = vpop.f32.mrb[0].mxu0
  %v636 = vadd.f32 %v537, %v635
  %v637 = vpop.f32.mrb[0].mxu0
  %638 = vmatprep.mubr.f32.mxu0 0.0
  %639 = vmatmul.mubr.f32.gmra.mrb[0].mxu0 %v491
  %v640 = vpop.f32.mrb[0].mxu0
  %v641 = vadd.f32 %v537, %v640
  %v642 = vpop.f32.mrb[0].mxu0
  %643 = vmatprep.mubr.f32.mxu0 0.0
  %644 = vmatmul.mubr.f32.gmra.mrb[0].mxu0 %v492
  %v645 = vpop.f32.mrb[0].mxu0
  %v646 = vadd.f32 %v537, %v645
  %v647 = vpop.f32.mrb[0].mxu0
  %648 = vmatprep.mubr.f32.mxu0 0.0
  %649 = vmatmul.mubr.f32.gmra.mrb[0].mxu0 %v493
  %v650 = vpop.f32.mrb[0].mxu0
  %v651 = vadd.f32 %v537, %v650
  %v652 = vpop.f32.mrb[0].mxu0
  %653 = vmatprep.mubr.f32.mxu0 0.0
  %654 = vmatmul.mubr.f32.gmra.mrb[0].mxu0 %v494
  %v655 = vpop.f32.mrb[0].mxu0
  %v656 = vadd.f32 %v537, %v655
  %v657 = vpop.f32.mrb[0].mxu0
  %658 = vmatprep.mubr.f32.mxu0 0.0
  %659 = vmatmul.mubr.f32.gmra.mrb[0].mxu0 %v495
  %v660 = vpop.f32.mrb[0].mxu0
  %v661 = vadd.f32 %v537, %v660
  %v662 = vpop.f32.mrb[0].mxu0
  %663 = vmatprep.mubr.f32.mxu0 0.0
  %664 = vmatmul.mubr.f32.gmra.mrb[0].mxu0 %v496
  %v665 = vpop.f32.mrb[0].mxu0
  %v666 = vadd.f32 %v537, %v665
  %v667 = vpop.f32.mrb[0].mxu0
  %668 = vmatprep.mubr.f32.mxu0 0.0
  %669 = vmatmul.mubr.f32.gmra.mrb[0].mxu0 %v497
  %v670 = vpop.f32.mrb[0].mxu0
  %v671 = vadd.f32 %v537, %v670
  %v672 = vpop.f32.mrb[0].mxu0
  %673 = vmatprep.mubr.f32.mxu0 0.0
  %674 = vmatmul.mubr.f32.gmra.mrb[0].mxu0 %v498
  %v675 = vpop.f32.mrb[0].mxu0
  %v676 = vadd.f32 %v537, %v675
  %v677 = vpop.f32.mrb[0].mxu0
  %678 = vmatprep.mubr.f32.mxu0 0.0
  %679 = vmatmul.mubr.f32.gmra.mrb[0].mxu0 %v499
  %v680 = vpop.f32.mrb[0].mxu0
  %v681 = vadd.f32 %v537, %v680
  %v682 = vpop.f32.mrb[0].mxu0
  %683 = vmatprep.mubr.f32.mxu0 0.0
  %684 = vmatmul.mubr.f32.gmra.mrb[0].mxu0 %v500
  %v685 = vpop.f32.mrb[0].mxu0
  %v686 = vadd.f32 %v537, %v685
  %v687 = vpop.f32.mrb[0].mxu0
  %688 = vmatprep.mubr.f32.mxu0 0.0
  %689 = vmatmul.mubr.f32.gmra.mrb[0].mxu0 %v501
  %v690 = vpop.f32.mrb[0].mxu0
  %v691 = vadd.f32 %v537, %v690
  %v692 = vpop.f32.mrb[0].mxu0
  %693 = vmatprep.mubr.f32.mxu0 0.0
  %694 = vmatmul.mubr.f32.gmra.mrb[0].mxu0 %v502
  %v695 = vpop.f32.mrb[0].mxu0
  %v696 = vadd.f32 %v537, %v695
  %v697 = vpop.f32.mrb[0].mxu0
  %698 = vmatprep.mubr.f32.mxu0 0.0
  %699 = vmatmul.mubr.f32.gmra.mrb[0].mxu0 %v503
  %v700 = vpop.f32.mrb[0].mxu0
  %v701 = vadd.f32 %v537, %v700
  %v702 = vpop.f32.mrb[0].mxu0
  %703 = vmatprep.mubr.f32.mxu0 0.0
  %704 = vmatmul.mubr.f32.gmra.mrb[0].mxu0 %v504
  %v705 = vpop.f32.mrb[0].mxu0
  %v706 = vadd.f32 %v537, %v705
  %v707 = vpop.f32.mrb[0].mxu0
  %708 = vmatprep.mubr.f32.mxu0 0.0
  %709 = vmatmul.mubr.f32.gmra.mrb[0].mxu0 %v505
  %v710 = vpop.f32.mrb[0].mxu0
  %v711 = vadd.f32 %v537, %v710
  %v712 = vpop.f32.mrb[0].mxu0
  %713 = vmatprep.mubr.f32.mxu0 0.0
  %714 = vmatmul.mubr.f32.gmra.mrb[0].mxu0 %v506
  %v715 = vpop.f32.mrb[0].mxu0
  %v716 = vadd.f32 %v537, %v715
  %v717 = vpop.f32.mrb[0].mxu0
  %718 = vmatprep.mubr.f32.mxu0 0.0
  %719 = vmatmul.mubr.f32.gmra.mrb[0].mxu0 %v507
  %v720 = vpop.f32.mrb[0].mxu0
  %v721 = vadd.f32 %v537, %v720
  %v722 = vpop.f32.mrb[0].mxu0
  %723 = vmatprep.mubr.f32.mxu0 0.0
  %724 = vmatmul.mubr.f32.gmra.mrb[0].mxu0 %v508
  %v725 = vpop.f32.mrb[0].mxu0
  %v726 = vadd.f32 %v537, %v725
  %v727 = vpop.f32.mrb[0].mxu0
  %728 = vmatprep.mubr.f32.mxu0 0.0
  %729 = vmatmul.mubr.f32.gmra.mrb[0].mxu0 %v509
  %v730 = vpop.f32.mrb[0].mxu0
  %v731 = vadd.f32 %v537, %v730
  %v732 = vpop.f32.mrb[0].mxu0
  %733 = vmatprep.mubr.f32.mxu0 0.0
  %734 = vmatmul.mubr.f32.gmra.mrb[0].mxu0 %v510
  %v735 = vpop.f32.mrb[0].mxu0
  %v736 = vadd.f32 %v537, %v735
  %v737 = vpop.f32.mrb[0].mxu0
  %738 = vmatprep.mubr.f32.mxu0 0.0
  %739 = vmatmul.mubr.f32.gmra.mrb[0].mxu0 %v511
  %v740 = vpop.f32.mrb[0].mxu0
  %v741 = vadd.f32 %v537, %v740
  %v742 = vpop.f32.mrb[0].mxu0
  %743 = vmatprep.mubr.f32.mxu0 0.0
  %744 = vmatmul.mubr.f32.gmra.mrb[0].mxu0 %v512
  %v745 = vpop.f32.mrb[0].mxu0
  %v746 = vadd.f32 %v537, %v745
  %v747 = vpop.f32.mrb[0].mxu0
  %748 = vmatprep.mubr.f32.mxu0 0.0
  %749 = vmatmul.mubr.f32.gmra.mrb[0].mxu0 %v513
  %v750 = vpop.f32.mrb[0].mxu0
  %v751 = vadd.f32 %v537, %v750
  %v752 = vpop.f32.mrb[0].mxu0
  %753 = vmatprep.mubr.f32.mxu0 0.0
  %754 = vmatmul.mubr.f32.gmra.mrb[0].mxu0 %v514
  %v755 = vpop.f32.mrb[0].mxu0
  %v756 = vadd.f32 %v537, %v755
  %v757 = vpop.f32.mrb[0].mxu0
  %758 = vmatprep.mubr.f32.mxu0 0.0
  %759 = vmatmul.mubr.f32.gmra.mrb[0].mxu0 %v515
  %v760 = vpop.f32.mrb[0].mxu0
  %v761 = vadd.f32 %v537, %v760
  %v762 = vpop.f32.mrb[0].mxu0
  %763 = vdwg.mxu0
  %vm764 = vcmask 15360
  %765 = vst.msk [vmem:[%s5] sm:$0xff] %vm764, %v606
  %766 = vst.msk [vmem:[%s5 + $0x8] sm:$0xff] %vm764, %v611
  %767 = vst.msk [vmem:[%s5 + $0x10] sm:$0xff] %vm764, %v616
  %768 = vst.msk [vmem:[%s5 + $0x18] sm:$0xff] %vm764, %v621
  %769 = vst.msk [vmem:[%s5 + $0x20] sm:$0xff] %vm764, %v626
  %770 = vst.msk [vmem:[%s5 + $0x28] sm:$0xff] %vm764, %v631
  %771 = vst.msk [vmem:[%s5 + $0x30] sm:$0xff] %vm764, %v636
  %772 = vst.msk [vmem:[%s5 + $0x38] sm:$0xff] %vm764, %v641
  %773 = vst.msk [vmem:[%s5 + $0x40] sm:$0xff] %vm764, %v646
  %774 = vst.msk [vmem:[%s5 + $0x48] sm:$0xff] %vm764, %v651
  %775 = vst.msk [vmem:[%s5 + $0x50] sm:$0xff] %vm764, %v656
  %776 = vst.msk [vmem:[%s5 + $0x58] sm:$0xff] %vm764, %v661
  %777 = vst.msk [vmem:[%s5 + $0x60] sm:$0xff] %vm764, %v666
  %778 = vst.msk [vmem:[%s5 + $0x68] sm:$0xff] %vm764, %v671
  %779 = vst.msk [vmem:[%s5 + $0x70] sm:$0xff] %vm764, %v676
  %780 = vst.msk [vmem:[%s5 + $0x78] sm:$0xff] %vm764, %v681
  %781 = vst.msk [vmem:[%s5 + $0x80] sm:$0xff] %vm764, %v686
  %782 = vst.msk [vmem:[%s5 + $0x88] sm:$0xff] %vm764, %v691
  %783 = vst.msk [vmem:[%s5 + $0x90] sm:$0xff] %vm764, %v696
  %784 = vst.msk [vmem:[%s5 + $0x98] sm:$0xff] %vm764, %v701
  %785 = vst.msk [vmem:[%s5 + $0xa0] sm:$0xff] %vm764, %v706
  %786 = vst.msk [vmem:[%s5 + $0xa8] sm:$0xff] %vm764, %v711
  %787 = vst.msk [vmem:[%s5 + $0xb0] sm:$0xff] %vm764, %v716
  %788 = vst.msk [vmem:[%s5 + $0xb8] sm:$0xff] %vm764, %v721
  %789 = vst.msk [vmem:[%s5 + $0xc0] sm:$0xff] %vm764, %v726
  %790 = vst.msk [vmem:[%s5 + $0xc8] sm:$0xff] %vm764, %v731
  %791 = vst.msk [vmem:[%s5 + $0xd0] sm:$0xff] %vm764, %v736
  %792 = vst.msk [vmem:[%s5 + $0xd8] sm:$0xff] %vm764, %v741
  %793 = vst.msk [vmem:[%s5 + $0xe0] sm:$0xff] %vm764, %v746
  %794 = vst.msk [vmem:[%s5 + $0xe8] sm:$0xff] %vm764, %v751
  %795 = vst.msk [vmem:[%s5 + $0xf0] sm:$0xff] %vm764, %v756
  %796 = vst.msk [vmem:[%s5 + $0xf8] sm:$0xff] %vm764, %v761
  // Predicated region
  $region22: #{tpu_custom_call.1} parent=0 // pred_check
    _
  $region23: #{tpu_custom_call.1} parent=0 // pred_check_branch
    %798 = sbr.rel (0) target = $region25
  $region24: #{tpu_custom_call.1} parent=0 // pred_region
    _
  $region25: #{tpu_custom_call.1} parent=0 // pred_fallthru
    _
  // Predicated region
  $region26: #{tpu_custom_call.1} parent=0 // pred_check
    _
  $region27: #{tpu_custom_call.1} parent=0 // pred_check_branch
    %800 = sbr.rel (0) target = $region29
  $region28: #{tpu_custom_call.1} parent=0 // pred_region
    _
  $region29: #{tpu_custom_call.1} parent=0 // pred_fallthru
    _

</llo_original>
